<compile_context>
chip_gen: v7x
topology: tpu7x:2x2x1
jax: 0.10.0
libtpu: 0.0.40
codegen_flags: <defaults>
</compile_context>

<pallas_src>
import functools

import jax
import jax.numpy as jnp
from jax.experimental import pallas as pl
from jax.experimental.pallas import tpu as pltpu


def cross_transformer_kernel(x_ref, q1_ref, wproj_ref, bproj_ref,
                             wm_ref, bm_ref, out_ref, *, width):
    # x_ref:   (1, P*4C, HW)  channel-concat [n1_b; n2_b] for P packed batches
    # q1_ref:  (1, P*C,  HW)
    # wproj:   (P*3C, P*4C)   fused Q|K|V, batch-block-diagonal
    # bproj:   (P*3C, 1)
    # wm:      (P*C, P*C)     mlp, batch-block-diagonal
    # bm:      (P*C, 1)
    # out_ref: (1, P*C, HW)
    HW = x_ref.shape[2]
    PC = wm_ref.shape[0]                       # packed channels = P * C
    W = width

    x = x_ref[0]                               # (P*4C, HW), spatial on lanes

    # Fused 1x1 conv (Q|K|V) + folded BatchNorm(eval) + ReLU: one MXU pass.
    proj = jnp.maximum(
        jnp.dot(wproj_ref[...], x, preferred_element_type=jnp.float32)
        + bproj_ref[...], 0.0)                 # (P*3C, HW)
    q = proj[:PC]
    k = proj[PC:2 * PC]
    v = proj[2 * PC:]

    att = q * k                                # (PC, HW)

    # --- Hoisted butterfly masks (built once, reused by all 3 reductions). ---
    # Partner for step s is lane ^ s; the select mask is derived from a rolled
    # lane-iota so it does not depend on pltpu.roll's direction convention.
    lane = jax.lax.broadcasted_iota(jnp.int32, att.shape, 1)
    steps = []
    s = 1
    while s < W:
        rolled = pltpu.roll(lane, shift=s, axis=1)
        steps.append((s, rolled == (lane ^ s)))
        s *= 2
    # TODO(synk): non-power-of-2 W would need a masked O(W) segmented reduce.

    def seg_allreduce(val, op):
        # All-reduce `op` within contiguous groups of W lanes; the result is
        # already broadcast across each group (XOR butterfly on the XLU).
        for step, use_fwd in steps:
            fwd = pltpu.roll(val, shift=step, axis=1)
            bwd = pltpu.roll(val, shift=HW - step, axis=1)
            val = op(val, jnp.where(use_fwd, fwd, bwd))
        return val

    # Softmax over the W axis == over contiguous groups of `width` lanes.
    m = seg_allreduce(att, jnp.maximum)        # per-group max (broadcast)
    e = jnp.exp(att - m)
    denom = seg_allreduce(e, jnp.add)          # per-group sum (broadcast)
    inv = pl.reciprocal(denom, approx=True)    # EUP
    inv = inv * (2.0 - denom * inv)            # one Newton step -> ~f32
    score = e * inv

    add_value = score * v                      # (PC, HW)

    # mlp: 1x1 conv (C -> C), batch-block-diagonal when P > 1.
    mlp = jnp.dot(wm_ref[...], add_value,
                  preferred_element_type=jnp.float32) + bm_ref[...]

    # max over W (broadcast within group), ReLU, + q_1.
    mx = seg_allreduce(mlp, jnp.maximum)
    out_ref[0] = jnp.maximum(mx, 0.0) + q1_ref[0]


def _pack_params(params, C, P):
    """Fused Q|K|V and mlp weights, block-diagonal over P packed batches.

    Row order of wproj: Q_b0..Q_b{P-1} | K_b0.. | V_b0..  (each C rows).
    Column order: per batch p, [n1_bp (2C cols); n2_bp (2C cols)].
    """
    wq, bq, wk, bk, wv, bv, wm, bm = params
    C2 = 2 * C
    PC = P * C
    wproj = jnp.zeros((3 * PC, 4 * PC), jnp.float32)
    bproj = jnp.zeros((3 * PC, 1), jnp.float32)
    wm_p = jnp.zeros((PC, PC), jnp.float32)
    bm_p = jnp.zeros((PC, 1), jnp.float32)
    for p in range(P):
        cn1 = p * 4 * C            # n1_bp column block
        cn2 = cn1 + C2             # n2_bp column block
        rq, rk, rv = p * C, PC + p * C, 2 * PC + p * C
        wproj = wproj.at[rq:rq + C, cn1:cn1 + C2].set(wq)
        wproj = wproj.at[rk:rk + C, cn2:cn2 + C2].set(wk)
        wproj = wproj.at[rv:rv + C, cn2:cn2 + C2].set(wv)
        bproj = bproj.at[rq:rq + C].set(bq)
        bproj = bproj.at[rk:rk + C].set(bk)
        bproj = bproj.at[rv:rv + C].set(bv)
        wm_p = wm_p.at[p * C:(p + 1) * C, p * C:(p + 1) * C].set(wm)
        bm_p = bm_p.at[p * C:(p + 1) * C].set(bm)
    return wproj, bproj, wm_p, bm_p


@jax.jit
def cross_transformer(n1, n2, q1, params):
    """n1, n2: (B, 2C, H, W); q1: (B, C, H, W). Returns (B, C, H, W)."""
    B, C2, H, W = n1.shape
    C = C2 // 2
    HW = H * W
    assert W > 0 and W & (W - 1) == 0, "segmented softmax butterfly needs power-of-2 W"
    assert HW % 128 == 0, "spatial slab must be lane-dense (H*W multiple of 128)"

    # Keep a 'parallel' grid axis with >= 2 steps for v7x's dual TensorCores:
    # pack 2 batches per step (sublane packing, block-diag weights) only when
    # B >= 4; for B == 2 stay one-batch-per-step.
    P = 2 if (B % 2 == 0 and B >= 4) else 1
    nsteps = B // P
    PC = P * C

    wproj, bproj, wm_p, bm_p = _pack_params(params, C, P)

    # NCHW consumed directly: free reshapes only (merge H,W; fold P batches
    # into the sublane axis).  The channel concat of n1|n2 (for the fused
    # Q|K|V matmul) is the only extra copy and is tiny at these sizes.
    xcat = jnp.concatenate(
        [n1.reshape(B, C2, HW), n2.reshape(B, C2, HW)], axis=1)   # (B, 4C, HW)
    x_in = xcat.reshape(nsteps, P * 4 * C, HW)
    q1_in = q1.reshape(nsteps, PC, HW)

    # v7x sizing guard (32 MiB scoped-VMEM default / 64 MiB physical): if C or
    # H*W grow, tile the HW axis in W-segment-aligned multiples of 128 instead
    # of taking the full slab.  At C=4, HW=256 this is ~100 KiB double-buffered.
    step_bytes = 4 * (P * 4 * C + 2 * PC) * HW + 4 * (
        wproj.size + bproj.size + wm_p.size + bm_p.size)
    assert 2 * step_bytes < 24 * 1024 * 1024, (
        "per-step slab too large for v7x VMEM: tile HW in W-aligned 128 chunks")

    # Advisory cost estimate: lets XLA schedule neighbours around this small,
    # overhead-dominated call.
    flops = 2 * B * (3 * C * 4 * C + C * C) * HW + 20 * B * C * HW
    bytes_accessed = 4 * (x_in.size + q1_in.size + nsteps * PC * HW
                          + wproj.size + bproj.size + wm_p.size + bm_p.size)
    cost = pl.CostEstimate(flops=flops,
                           transcendentals=2 * B * C * HW,
                           bytes_accessed=bytes_accessed)

    kernel = functools.partial(cross_transformer_kernel, width=W)
    out = pl.pallas_call(
        kernel,
        out_shape=jax.ShapeDtypeStruct((nsteps, PC, HW), jnp.float32),
        grid=(nsteps,),
        in_specs=[
            pl.BlockSpec((1, P * 4 * C, HW), lambda i: (i, 0, 0)),   # [n1;n2]
            pl.BlockSpec((1, PC, HW), lambda i: (i, 0, 0)),          # q1
            pl.BlockSpec((3 * PC, 4 * PC), lambda i: (0, 0)),        # fused QKV
            pl.BlockSpec((3 * PC, 1), lambda i: (0, 0)),
            pl.BlockSpec((PC, PC), lambda i: (0, 0)),                # mlp
            pl.BlockSpec((PC, 1), lambda i: (0, 0)),
        ],
        out_specs=pl.BlockSpec((1, PC, HW), lambda i: (i, 0, 0)),
        compiler_params=pltpu.CompilerParams(
            dimension_semantics=("parallel",)),
        cost_estimate=cost,
    )(x_in, q1_in, wproj, bproj, wm_p, bm_p)

    return out.reshape(B, C, H, W)


def init_params(key, C):
    """Deterministic params. Conv+BN (eval) folded to (Cout,Cin) / (Cout,1)."""
    C2 = 2 * C
    eps = 1e-5
    keys = jax.random.split(key, 14)

    def branch(i):
        w = 0.1 * jax.random.normal(keys[4 * i + 0], (C, C2), jnp.float32)  # (Cout,Cin)
        b = 0.1 * jax.random.normal(keys[4 * i + 1], (C,), jnp.float32)
        gamma = 1.0 + 0.1 * jax.random.normal(keys[4 * i + 2], (C,), jnp.float32)
        beta = 0.1 * jax.random.normal(keys[4 * i + 3], (C,), jnp.float32)
        mean = jnp.zeros((C,), jnp.float32)   # BN running stats (eval mode)
        var = jnp.ones((C,), jnp.float32)
        scale = gamma / jnp.sqrt(var + eps)
        w_fold = w * scale[:, None]                         # (Cout, Cin)
        b_fold = ((b - mean) * scale + beta).reshape(C, 1)  # (Cout, 1)
        return w_fold, b_fold

    wq, bq = branch(0)
    wk, bk = branch(1)
    wv, bv = branch(2)
    wm = 0.1 * jax.random.normal(keys[12], (C, C), jnp.float32)   # (Cout, Cin)
    bm = (0.1 * jax.random.normal(keys[13], (C,), jnp.float32)).reshape(C, 1)
    return wq, bq, wk, bk, wv, bv, wm, bm


def reference(n1, n2, q1, params):
    """Pure-JAX reference of the PyTorch forward (NCHW)."""
    wq, bq, wk, bk, wv, bv, wm, bm = params

    def proj(x, w, b):
        y = jnp.einsum('bchw,dc->bdhw', x, w) + b.reshape(1, -1, 1, 1)
        return jax.nn.relu(y)

    q = proj(n1, wq, bq)
    k = proj(n2, wk, bk)
    v = proj(n2, wv, bv)
    att = q * k
    score = jax.nn.softmax(att, axis=3)
    add_value = score * v
    add_value = jnp.einsum('bchw,dc->bdhw', add_value, wm) + bm.reshape(1, -1, 1, 1)
    out = jnp.max(add_value, axis=-1)
    out = jax.nn.relu(out)
    return out[..., None] + q1


if __name__ == "__main__":
    key = jax.random.PRNGKey(0)
    k_data, kp = jax.random.split(key, 2)
    C, H, W = 4, 16, 16
    params = init_params(kp, C)

    # B=2 exercises the one-batch-per-step path (v7x dual-core friendly);
    # B=4 exercises the 2-batch sublane-packed path with block-diag weights.
    for B in (2, 4):
        kb1, kb2, kb3 = jax.random.split(jax.random.fold_in(k_data, B), 3)
        n1 = jax.random.normal(kb1, (B, 2 * C, H, W), jnp.float32)
        n2 = jax.random.normal(kb2, (B, 2 * C, H, W), jnp.float32)
        q_1 = jax.random.normal(kb3, (B, C, H, W), jnp.float32)

        out = jax.block_until_ready(cross_transformer(n1, n2, q_1, params))
        ref = jax.block_until_ready(reference(n1, n2, q_1, params))

        assert out.shape == (B, C, H, W), out.shape
        max_err = float(jnp.max(jnp.abs(out - ref)))
        # 5e-4 tolerance: only extra error source vs the f32 reference is the
        # approx-reciprocal (+1 Newton step) in the softmax denominator.
        assert jnp.allclose(out, ref, rtol=5e-4, atol=5e-4), max_err

    print("KERNEL_OK")
</pallas_src>

<mosaic_0001>
module attributes {stable_mosaic.version = 11 : i64} {
  func.func @cross_transformer_kernel(%arg0: i32, %arg1: memref<1x16x256xf32, #tpu.memory_space<vmem>>, %arg2: memref<1x4x256xf32, #tpu.memory_space<vmem>>, %arg3: memref<12x16xf32, #tpu.memory_space<vmem>>, %arg4: memref<12x1xf32, #tpu.memory_space<vmem>>, %arg5: memref<4x4xf32, #tpu.memory_space<vmem>>, %arg6: memref<4x1xf32, #tpu.memory_space<vmem>>, %arg7: memref<1x4x256xf32, #tpu.memory_space<vmem>>) attributes {dimension_semantics = [#tpu.dimension_semantics<parallel>], iteration_bounds = array<i64: 2>, scalar_prefetch = 0 : i64, scratch_operands = 0 : i64, tpu.core_type = #tpu.core_type<tc>, window_params = [{transform_indices = @transform_0, window_bounds = array<i64: 1, 16, 256>}, {transform_indices = @transform_1, window_bounds = array<i64: 1, 4, 256>}, {pipeline_mode = #tpu.pipeline_mode<synchronous>, transform_indices = @transform_2, window_bounds = array<i64: 12, 16>}, {pipeline_mode = #tpu.pipeline_mode<synchronous>, transform_indices = @transform_3, window_bounds = array<i64: 12, 1>}, {pipeline_mode = #tpu.pipeline_mode<synchronous>, transform_indices = @transform_4, window_bounds = array<i64: 4, 4>}, {pipeline_mode = #tpu.pipeline_mode<synchronous>, transform_indices = @transform_5, window_bounds = array<i64: 4, 1>}, {transform_indices = @transform_6, window_bounds = array<i64: 1, 4, 256>}]} {
    %c0 = arith.constant 0 : index
    %c0_0 = arith.constant 0 : index
    %c0_1 = arith.constant 0 : index
    %0 = vector.load %arg1[%c0, %c0_0, %c0_1] : memref<1x16x256xf32, #tpu.memory_space<vmem>>, vector<1x16x256xf32>
    %1 = vector.shape_cast %0 : vector<1x16x256xf32> to vector<16x256xf32>
    %c0_2 = arith.constant 0 : index
    %c0_3 = arith.constant 0 : index
    %2 = vector.load %arg3[%c0_2, %c0_3] : memref<12x16xf32, #tpu.memory_space<vmem>>, vector<12x16xf32>
    %cst = arith.constant dense<0.000000e+00> : vector<12x256xf32>
    %3 = tpu.matmul %2, %1, %cst {dimension_numbers = #tpu.dot_dimension_numbers<[1], [0], [0], [1], [0, 0, 1, 1], [], []>} : vector<12x16xf32>, vector<16x256xf32>, vector<12x256xf32> -> vector<12x256xf32>
    %c0_4 = arith.constant 0 : index
    %c0_5 = arith.constant 0 : index
    %4 = vector.load %arg4[%c0_4, %c0_5] : memref<12x1xf32, #tpu.memory_space<vmem>>, vector<12x1xf32>
    %5 = vector.broadcast %4 : vector<12x1xf32> to vector<12x256xf32>
    %6 = arith.addf %3, %5 : vector<12x256xf32>
    %cst_6 = arith.constant 0.000000e+00 : f32
    %7 = vector.broadcast %cst_6 : f32 to vector<12x256xf32>
    %8 = arith.maximumf %6, %7 : vector<12x256xf32>
    %9 = vector.extract_strided_slice %8 {offsets = [0, 0], sizes = [4, 256], strides = [1, 1]} : vector<12x256xf32> to vector<4x256xf32>
    %10 = vector.extract_strided_slice %8 {offsets = [4, 0], sizes = [4, 256], strides = [1, 1]} : vector<12x256xf32> to vector<4x256xf32>
    %11 = vector.extract_strided_slice %8 {offsets = [8, 0], sizes = [4, 256], strides = [1, 1]} : vector<12x256xf32> to vector<4x256xf32>
    %12 = arith.mulf %9, %10 : vector<4x256xf32>
    %13 = tpu.iota {dimensions = array<i32: 1>} : vector<4x256xi32>
    %c1_i32 = arith.constant 1 : i32
    %14 = tpu.dynamic_rotate %13 by %c1_i32 dim 1 : vector<4x256xi32>, i32 -> vector<4x256xi32>
    %c1_i32_7 = arith.constant 1 : i32
    %15 = vector.broadcast %c1_i32_7 : i32 to vector<4x256xi32>
    %16 = arith.xori %13, %15 : vector<4x256xi32>
    %17 = arith.cmpi eq, %14, %16 : vector<4x256xi32>
    %c2_i32 = arith.constant 2 : i32
    %18 = tpu.dynamic_rotate %13 by %c2_i32 dim 1 : vector<4x256xi32>, i32 -> vector<4x256xi32>
    %c2_i32_8 = arith.constant 2 : i32
    %19 = vector.broadcast %c2_i32_8 : i32 to vector<4x256xi32>
    %20 = arith.xori %13, %19 : vector<4x256xi32>
    %21 = arith.cmpi eq, %18, %20 : vector<4x256xi32>
    %c4_i32 = arith.constant 4 : i32
    %22 = tpu.dynamic_rotate %13 by %c4_i32 dim 1 : vector<4x256xi32>, i32 -> vector<4x256xi32>
    %c4_i32_9 = arith.constant 4 : i32
    %23 = vector.broadcast %c4_i32_9 : i32 to vector<4x256xi32>
    %24 = arith.xori %13, %23 : vector<4x256xi32>
    %25 = arith.cmpi eq, %22, %24 : vector<4x256xi32>
    %c8_i32 = arith.constant 8 : i32
    %26 = tpu.dynamic_rotate %13 by %c8_i32 dim 1 : vector<4x256xi32>, i32 -> vector<4x256xi32>
    %c8_i32_10 = arith.constant 8 : i32
    %27 = vector.broadcast %c8_i32_10 : i32 to vector<4x256xi32>
    %28 = arith.xori %13, %27 : vector<4x256xi32>
    %29 = arith.cmpi eq, %26, %28 : vector<4x256xi32>
    %c1_i32_11 = arith.constant 1 : i32
    %30 = tpu.dynamic_rotate %12 by %c1_i32_11 dim 1 : vector<4x256xf32>, i32 -> vector<4x256xf32>
    %c255_i32 = arith.constant 255 : i32
    %31 = tpu.dynamic_rotate %12 by %c255_i32 dim 1 : vector<4x256xf32>, i32 -> vector<4x256xf32>
    %32 = arith.select %17, %30, %31 : vector<4x256xi1>, vector<4x256xf32>
    %33 = arith.maximumf %12, %32 : vector<4x256xf32>
    %c2_i32_12 = arith.constant 2 : i32
    %34 = tpu.dynamic_rotate %33 by %c2_i32_12 dim 1 : vector<4x256xf32>, i32 -> vector<4x256xf32>
    %c254_i32 = arith.constant 254 : i32
    %35 = tpu.dynamic_rotate %33 by %c254_i32 dim 1 : vector<4x256xf32>, i32 -> vector<4x256xf32>
    %36 = arith.select %21, %34, %35 : vector<4x256xi1>, vector<4x256xf32>
    %37 = arith.maximumf %33, %36 : vector<4x256xf32>
    %c4_i32_13 = arith.constant 4 : i32
    %38 = tpu.dynamic_rotate %37 by %c4_i32_13 dim 1 : vector<4x256xf32>, i32 -> vector<4x256xf32>
    %c252_i32 = arith.constant 252 : i32
    %39 = tpu.dynamic_rotate %37 by %c252_i32 dim 1 : vector<4x256xf32>, i32 -> vector<4x256xf32>
    %40 = arith.select %25, %38, %39 : vector<4x256xi1>, vector<4x256xf32>
    %41 = arith.maximumf %37, %40 : vector<4x256xf32>
    %c8_i32_14 = arith.constant 8 : i32
    %42 = tpu.dynamic_rotate %41 by %c8_i32_14 dim 1 : vector<4x256xf32>, i32 -> vector<4x256xf32>
    %c248_i32 = arith.constant 248 : i32
    %43 = tpu.dynamic_rotate %41 by %c248_i32 dim 1 : vector<4x256xf32>, i32 -> vector<4x256xf32>
    %44 = arith.select %29, %42, %43 : vector<4x256xi1>, vector<4x256xf32>
    %45 = arith.maximumf %41, %44 : vector<4x256xf32>
    %46 = arith.subf %12, %45 : vector<4x256xf32>
    %47 = math.exp %46 : vector<4x256xf32>
    %c1_i32_15 = arith.constant 1 : i32
    %48 = tpu.dynamic_rotate %47 by %c1_i32_15 dim 1 : vector<4x256xf32>, i32 -> vector<4x256xf32>
    %c255_i32_16 = arith.constant 255 : i32
    %49 = tpu.dynamic_rotate %47 by %c255_i32_16 dim 1 : vector<4x256xf32>, i32 -> vector<4x256xf32>
    %50 = arith.select %17, %48, %49 : vector<4x256xi1>, vector<4x256xf32>
    %51 = arith.addf %47, %50 : vector<4x256xf32>
    %c2_i32_17 = arith.constant 2 : i32
    %52 = tpu.dynamic_rotate %51 by %c2_i32_17 dim 1 : vector<4x256xf32>, i32 -> vector<4x256xf32>
    %c254_i32_18 = arith.constant 254 : i32
    %53 = tpu.dynamic_rotate %51 by %c254_i32_18 dim 1 : vector<4x256xf32>, i32 -> vector<4x256xf32>
    %54 = arith.select %21, %52, %53 : vector<4x256xi1>, vector<4x256xf32>
    %55 = arith.addf %51, %54 : vector<4x256xf32>
    %c4_i32_19 = arith.constant 4 : i32
    %56 = tpu.dynamic_rotate %55 by %c4_i32_19 dim 1 : vector<4x256xf32>, i32 -> vector<4x256xf32>
    %c252_i32_20 = arith.constant 252 : i32
    %57 = tpu.dynamic_rotate %55 by %c252_i32_20 dim 1 : vector<4x256xf32>, i32 -> vector<4x256xf32>
    %58 = arith.select %25, %56, %57 : vector<4x256xi1>, vector<4x256xf32>
    %59 = arith.addf %55, %58 : vector<4x256xf32>
    %c8_i32_21 = arith.constant 8 : i32
    %60 = tpu.dynamic_rotate %59 by %c8_i32_21 dim 1 : vector<4x256xf32>, i32 -> vector<4x256xf32>
    %c248_i32_22 = arith.constant 248 : i32
    %61 = tpu.dynamic_rotate %59 by %c248_i32_22 dim 1 : vector<4x256xf32>, i32 -> vector<4x256xf32>
    %62 = arith.select %29, %60, %61 : vector<4x256xi1>, vector<4x256xf32>
    %63 = arith.addf %59, %62 : vector<4x256xf32>
    %64 = tpu.reciprocal %63 {approx = true} : vector<4x256xf32> -> vector<4x256xf32>
    %65 = arith.mulf %63, %64 : vector<4x256xf32>
    %cst_23 = arith.constant 2.000000e+00 : f32
    %66 = vector.broadcast %cst_23 : f32 to vector<4x256xf32>
    %67 = arith.subf %66, %65 : vector<4x256xf32>
    %68 = arith.mulf %64, %67 : vector<4x256xf32>
    %69 = arith.mulf %47, %68 : vector<4x256xf32>
    %70 = arith.mulf %69, %11 : vector<4x256xf32>
    %c0_24 = arith.constant 0 : index
    %c0_25 = arith.constant 0 : index
    %71 = vector.load %arg5[%c0_24, %c0_25] : memref<4x4xf32, #tpu.memory_space<vmem>>, vector<4x4xf32>
    %cst_26 = arith.constant dense<0.000000e+00> : vector<4x256xf32>
    %72 = tpu.matmul %71, %70, %cst_26 {dimension_numbers = #tpu.dot_dimension_numbers<[1], [0], [0], [1], [0, 0, 1, 1], [], []>} : vector<4x4xf32>, vector<4x256xf32>, vector<4x256xf32> -> vector<4x256xf32>
    %c0_27 = arith.constant 0 : index
    %c0_28 = arith.constant 0 : index
    %73 = vector.load %arg6[%c0_27, %c0_28] : memref<4x1xf32, #tpu.memory_space<vmem>>, vector<4x1xf32>
    %74 = vector.broadcast %73 : vector<4x1xf32> to vector<4x256xf32>
    %75 = arith.addf %72, %74 : vector<4x256xf32>
    %c1_i32_29 = arith.constant 1 : i32
    %76 = tpu.dynamic_rotate %75 by %c1_i32_29 dim 1 : vector<4x256xf32>, i32 -> vector<4x256xf32>
    %c255_i32_30 = arith.constant 255 : i32
    %77 = tpu.dynamic_rotate %75 by %c255_i32_30 dim 1 : vector<4x256xf32>, i32 -> vector<4x256xf32>
    %78 = arith.select %17, %76, %77 : vector<4x256xi1>, vector<4x256xf32>
    %79 = arith.maximumf %75, %78 : vector<4x256xf32>
    %c2_i32_31 = arith.constant 2 : i32
    %80 = tpu.dynamic_rotate %79 by %c2_i32_31 dim 1 : vector<4x256xf32>, i32 -> vector<4x256xf32>
    %c254_i32_32 = arith.constant 254 : i32
    %81 = tpu.dynamic_rotate %79 by %c254_i32_32 dim 1 : vector<4x256xf32>, i32 -> vector<4x256xf32>
    %82 = arith.select %21, %80, %81 : vector<4x256xi1>, vector<4x256xf32>
    %83 = arith.maximumf %79, %82 : vector<4x256xf32>
    %c4_i32_33 = arith.constant 4 : i32
    %84 = tpu.dynamic_rotate %83 by %c4_i32_33 dim 1 : vector<4x256xf32>, i32 -> vector<4x256xf32>
    %c252_i32_34 = arith.constant 252 : i32
    %85 = tpu.dynamic_rotate %83 by %c252_i32_34 dim 1 : vector<4x256xf32>, i32 -> vector<4x256xf32>
    %86 = arith.select %25, %84, %85 : vector<4x256xi1>, vector<4x256xf32>
    %87 = arith.maximumf %83, %86 : vector<4x256xf32>
    %c8_i32_35 = arith.constant 8 : i32
    %88 = tpu.dynamic_rotate %87 by %c8_i32_35 dim 1 : vector<4x256xf32>, i32 -> vector<4x256xf32>
    %c248_i32_36 = arith.constant 248 : i32
    %89 = tpu.dynamic_rotate %87 by %c248_i32_36 dim 1 : vector<4x256xf32>, i32 -> vector<4x256xf32>
    %90 = arith.select %29, %88, %89 : vector<4x256xi1>, vector<4x256xf32>
    %91 = arith.maximumf %87, %90 : vector<4x256xf32>
    %cst_37 = arith.constant 0.000000e+00 : f32
    %92 = vector.broadcast %cst_37 : f32 to vector<4x256xf32>
    %93 = arith.maximumf %91, %92 : vector<4x256xf32>
    %c0_38 = arith.constant 0 : index
    %c0_39 = arith.constant 0 : index
    %c0_40 = arith.constant 0 : index
    %94 = vector.load %arg2[%c0_38, %c0_39, %c0_40] : memref<1x4x256xf32, #tpu.memory_space<vmem>>, vector<1x4x256xf32>
    %95 = vector.shape_cast %94 : vector<1x4x256xf32> to vector<4x256xf32>
    %96 = arith.addf %93, %95 : vector<4x256xf32>
    %c0_41 = arith.constant 0 : index
    %c0_42 = arith.constant 0 : index
    %c0_43 = arith.constant 0 : index
    %97 = vector.load %arg7[%c0_41, %c0_42, %c0_43] : memref<1x4x256xf32, #tpu.memory_space<vmem>>, vector<1x4x256xf32>
    %98 = vector.shape_cast %97 : vector<1x4x256xf32> to vector<4x256xf32>
    %99 = vector.shape_cast %96 : vector<4x256xf32> to vector<1x4x256xf32>
    tpu.vector_store %arg7[%c0_41, %c0_42, %c0_43], %99 {strides = array<i32>} : memref<1x4x256xf32, #tpu.memory_space<vmem>>, vector<1x4x256xf32>,
    return
  }
  func.func @transform_0(%arg0: i32) -> (i32, i32, i32) {
    %c0_i32 = arith.constant 0 : i32
    %c0_i32_0 = arith.constant 0 : i32
    %c0_i32_1 = arith.constant 0 : i32
    return %arg0, %c0_i32, %c0_i32_0 : i32, i32, i32
  }
  func.func @transform_1(%arg0: i32) -> (i32, i32, i32) {
    %c0_i32 = arith.constant 0 : i32
    %c0_i32_0 = arith.constant 0 : i32
    %c0_i32_1 = arith.constant 0 : i32
    return %arg0, %c0_i32, %c0_i32_0 : i32, i32, i32
  }
  func.func @transform_2(%arg0: i32) -> (i32, i32) {
    %c0_i32 = arith.constant 0 : i32
    %c0_i32_0 = arith.constant 0 : i32
    %c0_i32_1 = arith.constant 0 : i32
    return %c0_i32, %c0_i32_0 : i32, i32
  }
  func.func @transform_3(%arg0: i32) -> (i32, i32) {
    %c0_i32 = arith.constant 0 : i32
    %c0_i32_0 = arith.constant 0 : i32
    %c0_i32_1 = arith.constant 0 : i32
    return %c0_i32, %c0_i32_0 : i32, i32
  }
  func.func @transform_4(%arg0: i32) -> (i32, i32) {
    %c0_i32 = arith.constant 0 : i32
    %c0_i32_0 = arith.constant 0 : i32
    %c0_i32_1 = arith.constant 0 : i32
    return %c0_i32, %c0_i32_0 : i32, i32
  }
  func.func @transform_5(%arg0: i32) -> (i32, i32) {
    %c0_i32 = arith.constant 0 : i32
    %c0_i32_0 = arith.constant 0 : i32
    %c0_i32_1 = arith.constant 0 : i32
    return %c0_i32, %c0_i32_0 : i32, i32
  }
  func.func @transform_6(%arg0: i32) -> (i32, i32, i32) {
    %c0_i32 = arith.constant 0 : i32
    %c0_i32_0 = arith.constant 0 : i32
    %c0_i32_1 = arith.constant 0 : i32
    return %arg0, %c0_i32, %c0_i32_0 : i32, i32, i32
  }
}

</mosaic_0001>

<llo_original>
// kernel: cross_transformer.1
$region0: #{cross_transformer.1}
  #allocation0 [shape = 'u32[]', space=smem, size = 0x4, offset = 0x4, fixed_abs, tag = 'smem constant byte address 0x4 - core index']
  #allocation1 [shape = 'u32[144,128]{1,0:T(1,128)}', space=vmem, size = 0x12000, scoped, tag = 'internal scratch']
  %s0 = inlined_call_operand.vmem [shape: f32[2,16,256], index: 0, kind: input, shape index: {}]
  %s1 = inlined_call_operand.vmem [shape: f32[2,4,256], index: 1, kind: input, shape index: {}]
  %s2 = inlined_call_operand.vmem [shape: f32[12,16], index: 2, kind: input, shape index: {}]
  %s3 = inlined_call_operand.vmem [shape: f32[12,1], index: 3, kind: input, shape index: {}]
  %s4 = inlined_call_operand.vmem [shape: f32[4,4], index: 4, kind: input, shape index: {}]
  %s5 = inlined_call_operand.vmem [shape: f32[4,1], index: 5, kind: input, shape index: {}]
  %s6 = inlined_call_operand.vmem [shape: f32[2,4,256], index: 6, kind: output, shape index: {}]
  %s7 = sld [smem:[#allocation0]]
  $region57: #{cross_transformer.1} parent=0
    _
  %s9 = ssub.s32 1, %s7
  %s10 = scalar_select 0, %s9, %s7
  loop: start=0, step=1, limit=4
  $region2: #{cross_transformer.1} parent=0 // loop_pre_header
    _
  $region3: #{cross_transformer.1} parent=0 // loop_header
    %s12 = sphi 0, %s16
    %p13 = scmp.ge.s32.totalorder %s12, 4
    %s22 = sphi 0, %s24
    %s25 = sphi 0, %s22
    %s26 = sphi 0, %s25
    %s42 = sphi 0, %s26
    %s48 = sphi 0, %s50
    %s51 = sphi 0, %s48
    %s52 = sphi 0, %s51
    %s68 = sphi 0, %s52
    %s72 = sphi 0, %s72
    %s74 = sphi 0, %s72
    %s75 = sphi 0, %s74
    %s89 = sphi 0, %s75
    %s93 = sphi 0, %s93
    %s95 = sphi 0, %s93
    %s96 = sphi 0, %s95
    %s110 = sphi 0, %s96
    %s114 = sphi 0, %s114
    %s116 = sphi 0, %s114
    %s117 = sphi 0, %s116
    %s131 = sphi 0, %s117
    %s135 = sphi 0, %s135
    %s137 = sphi 0, %s135
    %s138 = sphi 0, %s137
    %s152 = sphi 0, %s138
    %s158 = sphi 0, %s160
    %s161 = sphi 0, %s158
    %s162 = sphi 0, %s161
    %s178 = sphi 0, %s162
  $region4: #{cross_transformer.1} parent=0 // loop_header_branch
    %15 = sbr.rel (%p13) target = $region8
  $region5: #{cross_transformer.1} parent=0 // loop_body
    %s17 = ssub.s32 %s12, 1
    %s18 = ssub.s32 %s12, 2
    %s19 = sadd.s32 %s12, 1
    %s20 = ssub.s32 %s12, %s19
    %p21 = scmp.eq.s32.totalorder %s20, 0
    %s23 = sadd.s32 %s22, 1
    %s24 = scalar_select %p21, %s22, %s23
    %p27 = pneg %p21
    %p28 = scmp.eq.s32.totalorder %s12, 1
    %p29 = por %p27, %p28
    %p30 = scmp.ne.s32.totalorder %s22, %s25
    %p31 = scmp.eq.s32.totalorder %s12, 0
    %p32 = por %p30, %p31
    %p33 = scmp.ne.s32.totalorder %s22, %s25
    %p34 = scmp.eq.s32.totalorder %s17, 1
    %p35 = por %p33, %p34
    %p36 = scmp.ne.s32.totalorder %s25, %s26
    %p37 = scmp.eq.s32.totalorder %s17, 0
    %p38 = por %p36, %p37
    %p39 = scmp.ne.s32.totalorder %s25, %s26
    %p40 = scmp.eq.s32.totalorder %s18, 1
    %p41 = por %p39, %p40
    %p43 = scmp.ne.s32.totalorder %s26, %s42
    %p44 = scmp.eq.s32.totalorder %s18, 0
    %p45 = por %p43, %p44
    %s46 = ssub.s32 %s12, %s19
    %p47 = scmp.eq.s32.totalorder %s46, 0
    %s49 = sadd.s32 %s48, 1
    %s50 = scalar_select %p47, %s48, %s49
    %p53 = pneg %p47
    %p54 = scmp.eq.s32.totalorder %s12, 1
    %p55 = por %p53, %p54
    %p56 = scmp.ne.s32.totalorder %s48, %s51
    %p57 = scmp.eq.s32.totalorder %s12, 0
    %p58 = por %p56, %p57
    %p59 = scmp.ne.s32.totalorder %s48, %s51
    %p60 = scmp.eq.s32.totalorder %s17, 1
    %p61 = por %p59, %p60
    %p62 = scmp.ne.s32.totalorder %s51, %s52
    %p63 = scmp.eq.s32.totalorder %s17, 0
    %p64 = por %p62, %p63
    %p65 = scmp.ne.s32.totalorder %s51, %s52
    %p66 = scmp.eq.s32.totalorder %s18, 1
    %p67 = por %p65, %p66
    %p69 = scmp.ne.s32.totalorder %s52, %s68
    %p70 = scmp.eq.s32.totalorder %s18, 0
    %p71 = por %p69, %p70
    %s73 = sadd.s32 %s72, 1
    %p76 = scmp.eq.s32.totalorder %s12, 1
    %p77 = scmp.ne.s32.totalorder %s72, %s74
    %p78 = scmp.eq.s32.totalorder %s12, 0
    %p79 = por %p77, %p78
    %p80 = scmp.ne.s32.totalorder %s72, %s74
    %p81 = scmp.eq.s32.totalorder %s17, 1
    %p82 = por %p80, %p81
    %p83 = scmp.ne.s32.totalorder %s74, %s75
    %p84 = scmp.eq.s32.totalorder %s17, 0
    %p85 = por %p83, %p84
    %p86 = scmp.ne.s32.totalorder %s74, %s75
    %p87 = scmp.eq.s32.totalorder %s18, 1
    %p88 = por %p86, %p87
    %p90 = scmp.ne.s32.totalorder %s75, %s89
    %p91 = scmp.eq.s32.totalorder %s18, 0
    %p92 = por %p90, %p91
    %s94 = sadd.s32 %s93, 1
    %p97 = scmp.eq.s32.totalorder %s12, 1
    %p98 = scmp.ne.s32.totalorder %s93, %s95
    %p99 = scmp.eq.s32.totalorder %s12, 0
    %p100 = por %p98, %p99
    %p101 = scmp.ne.s32.totalorder %s93, %s95
    %p102 = scmp.eq.s32.totalorder %s17, 1
    %p103 = por %p101, %p102
    %p104 = scmp.ne.s32.totalorder %s95, %s96
    %p105 = scmp.eq.s32.totalorder %s17, 0
    %p106 = por %p104, %p105
    %p107 = scmp.ne.s32.totalorder %s95, %s96
    %p108 = scmp.eq.s32.totalorder %s18, 1
    %p109 = por %p107, %p108
    %p111 = scmp.ne.s32.totalorder %s96, %s110
    %p112 = scmp.eq.s32.totalorder %s18, 0
    %p113 = por %p111, %p112
    %s115 = sadd.s32 %s114, 1
    %p118 = scmp.eq.s32.totalorder %s12, 1
    %p119 = scmp.ne.s32.totalorder %s114, %s116
    %p120 = scmp.eq.s32.totalorder %s12, 0
    %p121 = por %p119, %p120
    %p122 = scmp.ne.s32.totalorder %s114, %s116
    %p123 = scmp.eq.s32.totalorder %s17, 1
    %p124 = por %p122, %p123
    %p125 = scmp.ne.s32.totalorder %s116, %s117
    %p126 = scmp.eq.s32.totalorder %s17, 0
    %p127 = por %p125, %p126
    %p128 = scmp.ne.s32.totalorder %s116, %s117
    %p129 = scmp.eq.s32.totalorder %s18, 1
    %p130 = por %p128, %p129
    %p132 = scmp.ne.s32.totalorder %s117, %s131
    %p133 = scmp.eq.s32.totalorder %s18, 0
    %p134 = por %p132, %p133
    %s136 = sadd.s32 %s135, 1
    %p139 = scmp.eq.s32.totalorder %s12, 1
    %p140 = scmp.ne.s32.totalorder %s135, %s137
    %p141 = scmp.eq.s32.totalorder %s12, 0
    %p142 = por %p140, %p141
    %p143 = scmp.ne.s32.totalorder %s135, %s137
    %p144 = scmp.eq.s32.totalorder %s17, 1
    %p145 = por %p143, %p144
    %p146 = scmp.ne.s32.totalorder %s137, %s138
    %p147 = scmp.eq.s32.totalorder %s17, 0
    %p148 = por %p146, %p147
    %p149 = scmp.ne.s32.totalorder %s137, %s138
    %p150 = scmp.eq.s32.totalorder %s18, 1
    %p151 = por %p149, %p150
    %p153 = scmp.ne.s32.totalorder %s138, %s152
    %p154 = scmp.eq.s32.totalorder %s18, 0
    %p155 = por %p153, %p154
    %s156 = ssub.s32 %s12, %s19
    %p157 = scmp.eq.s32.totalorder %s156, 0
    %s159 = sadd.s32 %s158, 1
    %s160 = scalar_select %p157, %s158, %s159
    %p163 = pneg %p157
    %p164 = scmp.eq.s32.totalorder %s12, 1
    %p165 = por %p163, %p164
    %p166 = scmp.ne.s32.totalorder %s158, %s161
    %p167 = scmp.eq.s32.totalorder %s12, 0
    %p168 = por %p166, %p167
    %p169 = scmp.ne.s32.totalorder %s158, %s161
    %p170 = scmp.eq.s32.totalorder %s17, 1
    %p171 = por %p169, %p170
    %p172 = scmp.ne.s32.totalorder %s161, %s162
    %p173 = scmp.eq.s32.totalorder %s17, 0
    %p174 = por %p172, %p173
    %p175 = scmp.ne.s32.totalorder %s161, %s162
    %p176 = scmp.eq.s32.totalorder %s18, 1
    %p177 = por %p175, %p176
    %p179 = scmp.ne.s32.totalorder %s162, %s178
    %p180 = scmp.eq.s32.totalorder %s18, 0
    %p181 = por %p179, %p180
    %p182 = scmp.le.s32.totalorder 1, %s12
    %p183 = scmp.lt.s32.totalorder %s12, 3
    %p184 = pnand %p182, %p183
    %p185 = pneg %p184
    // Predicated region
    $region9: #{cross_transformer.1} parent=5 // pred_check
      _
    $region10: #{cross_transformer.1} parent=5 // pred_check_branch
      %187 = sbr.rel (%p184) target = $region12
    $region11: #{cross_transformer.1} parent=5 // pred_region
      %s188 = ssub.s32 %s12, 1
      // Predicated region
      $region13: #{cross_transformer.1} parent=11 // pred_check
        %p189 = pneg %p85
      $region14: #{cross_transformer.1} parent=11 // pred_check_branch
        %191 = sbr.rel (%p189) target = $region16
      $region15: #{cross_transformer.1} parent=11 // pred_region
        _
      $region16: #{cross_transformer.1} parent=11 // pred_fallthru
        _
      // Predicated region
      $region17: #{cross_transformer.1} parent=11 // pred_check
        %p192 = pneg %p106
      $region18: #{cross_transformer.1} parent=11 // pred_check_branch
        %194 = sbr.rel (%p192) target = $region20
      $region19: #{cross_transformer.1} parent=11 // pred_region
        _
      $region20: #{cross_transformer.1} parent=11 // pred_fallthru
        _
      // Predicated region
      $region21: #{cross_transformer.1} parent=11 // pred_check
        %p195 = pneg %p127
      $region22: #{cross_transformer.1} parent=11 // pred_check_branch
        %197 = sbr.rel (%p195) target = $region24
      $region23: #{cross_transformer.1} parent=11 // pred_region
        _
      $region24: #{cross_transformer.1} parent=11 // pred_fallthru
        _
      // Predicated region
      $region25: #{cross_transformer.1} parent=11 // pred_check
        %p198 = pneg %p148
      $region26: #{cross_transformer.1} parent=11 // pred_check_branch
        %200 = sbr.rel (%p198) target = $region28
      $region27: #{cross_transformer.1} parent=11 // pred_region
        _
      $region28: #{cross_transformer.1} parent=11 // pred_fallthru
        _
    $region12: #{cross_transformer.1} parent=5 // pred_fallthru
      _
    %p201 = scmp.lt.s32.totalorder %s12, 2
    // Predicated region
    $region29: #{cross_transformer.1} parent=5 // pred_check
      %p202 = pneg %p201
    $region30: #{cross_transformer.1} parent=5 // pred_check_branch
      %204 = sbr.rel (%p202) target = $region32
    $region31: #{cross_transformer.1} parent=5 // pred_region
      // Predicated region
      $region33: #{cross_transformer.1} parent=31 // pred_check
        %p205 = pneg %p32
      $region34: #{cross_transformer.1} parent=31 // pred_check_branch
        %207 = sbr.rel (%p205) target = $region36
      $region35: #{cross_transformer.1} parent=31 // pred_region
        %p208 = scmp.lt.s32.totalorder %s12, 1
        %s209 = scalar_select %p208, %s12, 1
        %s210 = smul.addr %s209, 4
        %s211 = smul.addr %s210, 8
        %s212 = scalar_lea.vmem %s0, %s211
      $region36: #{cross_transformer.1} parent=31 // pred_fallthru
        _
      // Predicated region
      $region37: #{cross_transformer.1} parent=31 // pred_check
        %p213 = pneg %p58
      $region38: #{cross_transformer.1} parent=31 // pred_check_branch
        %215 = sbr.rel (%p213) target = $region40
      $region39: #{cross_transformer.1} parent=31 // pred_region
        %p216 = scmp.lt.s32.totalorder %s12, 1
        %s217 = scalar_select %p216, %s12, 1
        %s218 = smul.addr %s217, 2
        %s219 = smul.addr %s218, 4
        %s220 = scalar_lea.vmem %s1, %s219
      $region40: #{cross_transformer.1} parent=31 // pred_fallthru
        _
    $region32: #{cross_transformer.1} parent=5 // pred_fallthru
      _
    %p221 = scmp.le.s32.totalorder 1, %s12
    %p222 = scmp.lt.s32.totalorder %s12, 3
    %p223 = pnand %p221, %p222
    %p224 = pneg %p223
    // Predicated region
    $region41: #{cross_transformer.1} parent=5 // pred_check
      _
    $region42: #{cross_transformer.1} parent=5 // pred_check_branch
      %226 = sbr.rel (%p223) target = $region44
    $region43: #{cross_transformer.1} parent=5 // pred_region
      %s227 = ssub.s32 %s12, 1
      %p228 = scmp.lt.s32.totalorder %s17, 1
      %s229 = scalar_select %p228, %s17, 1
      %s230 = smul.addr %s229, 4
      %s231 = smul.addr %s230, 8
      %s232 = scalar_lea.vmem %s0, %s231
      %p233 = pneg %p38
      %p234 = pneg %p35
      %p235 = scmp.lt.s32.totalorder %s17, 1
      %s236 = scalar_select %p235, %s17, 1
      %s237 = smul.addr %s236, 2
      %s238 = smul.addr %s237, 4
      %s239 = scalar_lea.vmem %s1, %s238
      %p240 = pneg %p64
      %p241 = pneg %p61
      %p242 = pneg %p85
      %p243 = pneg %p82
      %p244 = pneg %p106
      %p245 = pneg %p103
      %p246 = pneg %p127
      %p247 = pneg %p124
      %p248 = pneg %p148
      %p249 = pneg %p145
      %p250 = pneg %p174
      %p251 = pneg %p171
      %p252 = scmp.lt.s32.totalorder %s17, 1
      %s253 = scalar_select %p252, %s17, 1
      %s254 = smul.addr %s253, 2
      %s255 = smul.addr %s254, 4
      %s256 = scalar_lea.vmem %s6, %s255
      %p257 = scmp.lt.s32.totalorder %s17, 1
      %s258 = scalar_select %p257, %s17, 1
      %s259 = smul.addr %s258, 4
      %s260 = smul.addr %s259, 8
      %s261 = scalar_lea.vmem %s0, %s260
      %p262 = scmp.lt.s32.totalorder %s17, 1
      %s263 = scalar_select %p262, %s17, 1
      %s264 = smul.addr %s263, 2
      %s265 = smul.addr %s264, 4
      %s266 = scalar_lea.vmem %s1, %s265
      %p267 = scmp.lt.s32.totalorder %s17, 1
      %s268 = scalar_select %p267, %s17, 1
      %s269 = smul.addr %s268, 2
      %s270 = smul.addr %s269, 4
      %s271 = scalar_lea.vmem %s6, %s270
      %v272 = vld [vmem:[%s261] sm:$0xff]
      %v273 = vld [vmem:[%s261 + $0x8] sm:$0xff]
      %v274 = vld [vmem:[%s261 + $0x10] sm:$0xff]
      %v275 = vld [vmem:[%s261 + $0x18] sm:$0xff]
      %v276 = vld [vmem:[%s2] sm:$0xff]
      %v277 = vld [vmem:[%s2 + $0x8] sm:$0xf]
      %v278 = vld [vmem:[%s3] sm:$0xff]
      %v279 = vld [vmem:[%s3 + $0x8] sm:$0xf]
      %281 = vset.pattern.permute.xlu0 0
      %282 = vperm.xlu0 %281, %v278
      %v283 = vpop.permute.xlu0 %282
      %286 = vset.pattern.permute.xlu0 0
      %287 = vperm.xlu0 %286, %v279
      %v288 = vpop.permute.xlu0 %287
      %vm290 = vcmask 130048
      %v292 = vsel %vm290, %v276, 0
      %v295 = vsel %vm290, %v277, 0
      %297 = vmatprep.subr.mxu0 %v273
      %298 = vmatpush1.msra.mxu0 %v272
      %299 = vmatprep.subr.mxu0 %v275
      %300 = vmatpush1.msra.mxu0 %v274
      %301 = vmatprep.subr.mxu0 0.0
      %302 = vmatpush1.msra.mxu0 0.0
      %303 = vmatprep.subr.mxu0 0.0
      %304 = vmatpush1.msra.mxu0 0.0
      %305 = vmatprep.subr.mxu0 0.0
      %306 = vmatpush1.msra.mxu0 0.0
      %307 = vmatprep.subr.mxu0 0.0
      %308 = vmatpush1.msra.mxu0 0.0
      %309 = vmatprep.subr.mxu0 0.0
      %310 = vmatpush1.msra.mxu0 0.0
      %311 = vmatprep.subr.mxu0 0.0
      %312 = vmatpush1.msra.mxu0 0.0
      %313 = vmatprep.subr.mxu0 0.0
      %314 = vmatpush1.msra.mxu0 0.0
      %315 = vmatprep.subr.mxu0 0.0
      %316 = vmatpush1.msra.mxu0 0.0
      %317 = vmatprep.subr.mxu0 0.0
      %318 = vmatpush1.msra.mxu0 0.0
      %319 = vmatprep.subr.mxu0 0.0
      %320 = vmatpush1.msra.mxu0 0.0
      %321 = vmatprep.subr.mxu0 0.0
      %322 = vmatpush1.msra.mxu0 0.0
      %323 = vmatprep.subr.mxu0 0.0
      %324 = vmatpush1.msra.mxu0 0.0
      %325 = vmatprep.subr.mxu0 0.0
      %326 = vmatpush1.msra.mxu0 0.0
      %327 = vmatprep.subr.mxu0 0.0
      %328 = vmatpush1.msra.mxu0 0.0
      %329 = vmatprep.subr.mxu0 0.0
      %330 = vmatpush1.msra.mxu0 0.0
      %331 = vmatprep.subr.mxu0 0.0
      %332 = vmatpush1.msra.mxu0 0.0
      %333 = vmatprep.subr.mxu0 0.0
      %334 = vmatpush1.msra.mxu0 0.0
      %335 = vmatprep.subr.mxu0 0.0
      %336 = vmatpush1.msra.mxu0 0.0
      %337 = vmatprep.subr.mxu0 0.0
      %338 = vmatpush1.msra.mxu0 0.0
      %339 = vmatprep.subr.mxu0 0.0
      %340 = vmatpush1.msra.mxu0 0.0
      %341 = vmatprep.subr.mxu0 0.0
      %342 = vmatpush1.msra.mxu0 0.0
      %343 = vmatprep.subr.mxu0 0.0
      %344 = vmatpush1.msra.mxu0 0.0
      %345 = vmatprep.subr.mxu0 0.0
      %346 = vmatpush1.msra.mxu0 0.0
      %347 = vmatprep.subr.mxu0 0.0
      %348 = vmatpush1.msra.mxu0 0.0
      %349 = vmatprep.subr.mxu0 0.0
      %350 = vmatpush1.msra.mxu0 0.0
      %351 = vmatprep.subr.mxu0 0.0
      %352 = vmatpush1.msra.mxu0 0.0
      %353 = vmatprep.subr.mxu0 0.0
      %354 = vmatpush1.msra.mxu0 0.0
      %355 = vmatprep.subr.mxu0 0.0
      %356 = vmatpush1.msra.mxu0 0.0
      %357 = vmatprep.subr.mxu0 0.0
      %358 = vmatpush1.msra.mxu0 0.0
      %359 = vmatprep.subr.mxu0 0.0
      %360 = vmatpush1.msra.mxu0 0.0
      %361 = vmatprep.mubr.f32.mxu0 0.0
      %362 = vmatmul.mubr.f32.gmra.mrb[0].mxu0 %v292
      %v363 = vpop.f32.mrb[0].mxu0
      %v364 = vadd.f32 %v283, %v363
      %v365 = vpop.f32.mrb[0].mxu0
      %v366 = vadd.f32 %v283, %v365
      %367 = vmatprep.mubr.f32.mxu0 0.0
      %368 = vmatmul.mubr.f32.gmra.mrb[0].mxu0 %v295
      %v369 = vpop.f32.mrb[0].mxu0
      %v370 = vadd.f32 %v288, %v369
      %v371 = vpop.f32.mrb[0].mxu0
      %v372 = vadd.f32 %v288, %v371
      %373 = vdwg.mxu0
      %v374 = vmax.f32 %v364, 0.0
      %v375 = vmax.f32 %v366, 0.0
      %v376 = vmax.f32 %v370, 0.0
      %v377 = vmax.f32 %v372, 0.0
      %v380 = vrot.slane %v374, 4
      %v381 = vrot.slane %v375, 4
      %v384 = vmul.f32 %v374, %v380
      %v385 = vmul.f32 %v375, %v381
      %v386 = vlaneseq
      %v387 = vand.u32 %v386, 127
      %v388 = vadd.s32 %v387, 128
      %389 = vrot.lane.b32.xlu0 %v387, 1
      %v390 = vpop.permute.xlu0 %389
      %391 = vrot.lane.b32.xlu0 %v388, 1
      %v392 = vpop.permute.xlu0 %391
      %vm393 = vcmp.lt.s32.totalorder %v387, 1
      %v394 = vsel %vm393, %v390, %v392
      %v395 = vsel %vm393, %v392, %v390
      %v396 = vxor.u32 %v387, 1
      %v397 = vxor.u32 %v388, 1
      %vm398 = vcmp.eq.s32.totalorder %v395, %v396
      %vm399 = vcmp.eq.s32.totalorder %v394, %v397
      %400 = vrot.lane.b32.xlu0 %v387, 2
      %v401 = vpop.permute.xlu0 %400
      %402 = vrot.lane.b32.xlu0 %v388, 2
      %v403 = vpop.permute.xlu0 %402
      %vm404 = vcmp.lt.s32.totalorder %v387, 2
      %v405 = vsel %vm404, %v401, %v403
      %v406 = vsel %vm404, %v403, %v401
      %v407 = vxor.u32 %v387, 2
      %v408 = vxor.u32 %v388, 2
      %vm409 = vcmp.eq.s32.totalorder %v406, %v407
      %vm410 = vcmp.eq.s32.totalorder %v405, %v408
      %411 = vrot.lane.b32.xlu0 %v387, 4
      %v412 = vpop.permute.xlu0 %411
      %413 = vrot.lane.b32.xlu0 %v388, 4
      %v414 = vpop.permute.xlu0 %413
      %vm415 = vcmp.lt.s32.totalorder %v387, 4
      %v416 = vsel %vm415, %v412, %v414
      %v417 = vsel %vm415, %v414, %v412
      %v418 = vxor.u32 %v387, 4
      %v419 = vxor.u32 %v388, 4
      %vm420 = vcmp.eq.s32.totalorder %v417, %v418
      %vm421 = vcmp.eq.s32.totalorder %v416, %v419
      %422 = vrot.lane.b32.xlu0 %v387, 8
      %v423 = vpop.permute.xlu0 %422
      %424 = vrot.lane.b32.xlu0 %v388, 8
      %v425 = vpop.permute.xlu0 %424
      %vm426 = vcmp.lt.s32.totalorder %v387, 8
      %v427 = vsel %vm426, %v423, %v425
      %v428 = vsel %vm426, %v425, %v423
      %v429 = vxor.u32 %v387, 8
      %v430 = vxor.u32 %v388, 8
      %vm431 = vcmp.eq.s32.totalorder %v428, %v429
      %vm432 = vcmp.eq.s32.totalorder %v427, %v430
      %433 = vrot.lane.b32.xlu0 %v384, 1
      %v434 = vpop.permute.xlu0 %433
      %435 = vrot.lane.b32.xlu0 %v385, 1
      %v436 = vpop.permute.xlu0 %435
      %v437 = vsel %vm393, %v434, %v436
      %v438 = vsel %vm393, %v436, %v434
      %439 = vrot.lane.b32.xlu0 %v384, 127
      %v440 = vpop.permute.xlu0 %439
      %441 = vrot.lane.b32.xlu0 %v385, 127
      %v442 = vpop.permute.xlu0 %441
      %vm443 = vcmp.lt.s32.totalorder %v387, 127
      %v444 = vsel %vm443, %v440, %v442
      %v445 = vsel %vm443, %v442, %v440
      %v446 = vsel %vm398, %v438, %v444
      %v447 = vsel %vm399, %v437, %v445
      %v448 = vmax.f32 %v384, %v446
      %v449 = vmax.f32 %v385, %v447
      %450 = vrot.lane.b32.xlu0 %v448, 2
      %v451 = vpop.permute.xlu0 %450
      %452 = vrot.lane.b32.xlu0 %v449, 2
      %v453 = vpop.permute.xlu0 %452
      %v454 = vsel %vm404, %v451, %v453
      %v455 = vsel %vm404, %v453, %v451
      %456 = vrot.lane.b32.xlu0 %v448, 126
      %v457 = vpop.permute.xlu0 %456
      %458 = vrot.lane.b32.xlu0 %v449, 126
      %v459 = vpop.permute.xlu0 %458
      %vm460 = vcmp.lt.s32.totalorder %v387, 126
      %v461 = vsel %vm460, %v457, %v459
      %v462 = vsel %vm460, %v459, %v457
      %v463 = vsel %vm409, %v455, %v461
      %v464 = vsel %vm410, %v454, %v462
      %v465 = vmax.f32 %v448, %v463
      %v466 = vmax.f32 %v449, %v464
      %467 = vrot.lane.b32.xlu0 %v465, 4
      %v468 = vpop.permute.xlu0 %467
      %469 = vrot.lane.b32.xlu0 %v466, 4
      %v470 = vpop.permute.xlu0 %469
      %v471 = vsel %vm415, %v468, %v470
      %v472 = vsel %vm415, %v470, %v468
      %473 = vrot.lane.b32.xlu0 %v465, 124
      %v474 = vpop.permute.xlu0 %473
      %475 = vrot.lane.b32.xlu0 %v466, 124
      %v476 = vpop.permute.xlu0 %475
      %vm477 = vcmp.lt.s32.totalorder %v387, 124
      %v478 = vsel %vm477, %v474, %v476
      %v479 = vsel %vm477, %v476, %v474
      %v480 = vsel %vm420, %v472, %v478
      %v481 = vsel %vm421, %v471, %v479
      %v482 = vmax.f32 %v465, %v480
      %v483 = vmax.f32 %v466, %v481
      %484 = vrot.lane.b32.xlu0 %v482, 8
      %v485 = vpop.permute.xlu0 %484
      %486 = vrot.lane.b32.xlu0 %v483, 8
      %v487 = vpop.permute.xlu0 %486
      %v488 = vsel %vm426, %v485, %v487
      %v489 = vsel %vm426, %v487, %v485
      %490 = vrot.lane.b32.xlu0 %v482, 120
      %v491 = vpop.permute.xlu0 %490
      %492 = vrot.lane.b32.xlu0 %v483, 120
      %v493 = vpop.permute.xlu0 %492
      %vm494 = vcmp.lt.s32.totalorder %v387, 120
      %v495 = vsel %vm494, %v491, %v493
      %v496 = vsel %vm494, %v493, %v491
      %v497 = vsel %vm431, %v489, %v495
      %v498 = vsel %vm432, %v488, %v496
      %v499 = vmax.f32 %v482, %v497
      %v500 = vmax.f32 %v483, %v498
      %v501 = vsub.f32 %v384, %v499
      %v502 = vsub.f32 %v385, %v500
      %v503 = vmul.f32 %v501, 1.442695
      %v504 = vpow.pop %v503
      %v505 = vmul.f32 %v502, 1.442695
      %v506 = vpow.pop %v505
      %507 = vrot.lane.b32.xlu0 %v504, 1
      %v508 = vpop.permute.xlu0 %507
      %509 = vrot.lane.b32.xlu0 %v506, 1
      %v510 = vpop.permute.xlu0 %509
      %v511 = vsel %vm393, %v508, %v510
      %v512 = vsel %vm393, %v510, %v508
      %513 = vrot.lane.b32.xlu0 %v504, 127
      %v514 = vpop.permute.xlu0 %513
      %515 = vrot.lane.b32.xlu0 %v506, 127
      %v516 = vpop.permute.xlu0 %515
      %v517 = vsel %vm443, %v514, %v516
      %v518 = vsel %vm443, %v516, %v514
      %v519 = vsel %vm398, %v512, %v517
      %v520 = vsel %vm399, %v511, %v518
      %v521 = vadd.f32 %v504, %v519
      %v522 = vadd.f32 %v506, %v520
      %523 = vrot.lane.b32.xlu0 %v521, 2
      %v524 = vpop.permute.xlu0 %523
      %525 = vrot.lane.b32.xlu0 %v522, 2
      %v526 = vpop.permute.xlu0 %525
      %v527 = vsel %vm404, %v524, %v526
      %v528 = vsel %vm404, %v526, %v524
      %529 = vrot.lane.b32.xlu0 %v521, 126
      %v530 = vpop.permute.xlu0 %529
      %531 = vrot.lane.b32.xlu0 %v522, 126
      %v532 = vpop.permute.xlu0 %531
      %v533 = vsel %vm460, %v530, %v532
      %v534 = vsel %vm460, %v532, %v530
      %v535 = vsel %vm409, %v528, %v533
      %v536 = vsel %vm410, %v527, %v534
      %v537 = vadd.f32 %v521, %v535
      %v538 = vadd.f32 %v522, %v536
      %539 = vrot.lane.b32.xlu0 %v537, 4
      %v540 = vpop.permute.xlu0 %539
      %541 = vrot.lane.b32.xlu0 %v538, 4
      %v542 = vpop.permute.xlu0 %541
      %v543 = vsel %vm415, %v540, %v542
      %v544 = vsel %vm415, %v542, %v540
      %545 = vrot.lane.b32.xlu0 %v537, 124
      %v546 = vpop.permute.xlu0 %545
      %547 = vrot.lane.b32.xlu0 %v538, 124
      %v548 = vpop.permute.xlu0 %547
      %v549 = vsel %vm477, %v546, %v548
      %v550 = vsel %vm477, %v548, %v546
      %v551 = vsel %vm420, %v544, %v549
      %v552 = vsel %vm421, %v543, %v550
      %v553 = vadd.f32 %v537, %v551
      %v554 = vadd.f32 %v538, %v552
      %555 = vrot.lane.b32.xlu0 %v553, 8
      %v556 = vpop.permute.xlu0 %555
      %557 = vrot.lane.b32.xlu0 %v554, 8
      %v558 = vpop.permute.xlu0 %557
      %v559 = vsel %vm426, %v556, %v558
      %v560 = vsel %vm426, %v558, %v556
      %561 = vrot.lane.b32.xlu0 %v553, 120
      %v562 = vpop.permute.xlu0 %561
      %563 = vrot.lane.b32.xlu0 %v554, 120
      %v564 = vpop.permute.xlu0 %563
      %v565 = vsel %vm494, %v562, %v564
      %v566 = vsel %vm494, %v564, %v562
      %v567 = vsel %vm431, %v560, %v565
      %v568 = vsel %vm432, %v559, %v566
      %v569 = vadd.f32 %v553, %v567
      %v570 = vadd.f32 %v554, %v568
      %v571 = vrcp.pop %v569
      %v572 = vrcp.pop %v570
      %v573 = vmul.f32 %v569, %v571
      %v574 = vmul.f32 %v570, %v572
      %v575 = vsub.f32 2.0, %v573
      %v576 = vsub.f32 2.0, %v574
      %v577 = vmul.f32 %v571, %v575
      %v578 = vmul.f32 %v572, %v576
      %v579 = vmul.f32 %v504, %v577
      %v580 = vmul.f32 %v506, %v578
      %v581 = vmul.f32 %v579, %v376
      %v582 = vmul.f32 %v580, %v377
      %v583 = vld [vmem:[%s4] sm:$0xf]
      %v584 = vld [vmem:[%s5] sm:$0xf]
      %586 = vset.pattern.permute.xlu0 0
      %587 = vperm.xlu0 %586, %v584
      %v588 = vpop.permute.xlu0 %587
      %vm590 = vcmask 31744
      %v592 = vsel %vm590, %v583, 0
      %vm594 = vcmask 1043456
      %v596 = vsel %vm594, %v581, 0
      %v599 = vsel %vm594, %v582, 0
      %601 = vmatprep.subr.mxu0 %v599
      %602 = vmatpush1.msra.mxu0 %v596
      %603 = vmatprep.subr.mxu0 0.0
      %604 = vmatpush1.msra.mxu0 0.0
      %605 = vmatprep.subr.mxu0 0.0
      %606 = vmatpush1.msra.mxu0 0.0
      %607 = vmatprep.subr.mxu0 0.0
      %608 = vmatpush1.msra.mxu0 0.0
      %609 = vmatprep.subr.mxu0 0.0
      %610 = vmatpush1.msra.mxu0 0.0
      %611 = vmatprep.subr.mxu0 0.0
      %612 = vmatpush1.msra.mxu0 0.0
      %613 = vmatprep.subr.mxu0 0.0
      %614 = vmatpush1.msra.mxu0 0.0
      %615 = vmatprep.subr.mxu0 0.0
      %616 = vmatpush1.msra.mxu0 0.0
      %617 = vmatprep.subr.mxu0 0.0
      %618 = vmatpush1.msra.mxu0 0.0
      %619 = vmatprep.subr.mxu0 0.0
      %620 = vmatpush1.msra.mxu0 0.0
      %621 = vmatprep.subr.mxu0 0.0
      %622 = vmatpush1.msra.mxu0 0.0
      %623 = vmatprep.subr.mxu0 0.0
      %624 = vmatpush1.msra.mxu0 0.0
      %625 = vmatprep.subr.mxu0 0.0
      %626 = vmatpush1.msra.mxu0 0.0
      %627 = vmatprep.subr.mxu0 0.0
      %628 = vmatpush1.msra.mxu0 0.0
      %629 = vmatprep.subr.mxu0 0.0
      %630 = vmatpush1.msra.mxu0 0.0
      %631 = vmatprep.subr.mxu0 0.0
      %632 = vmatpush1.msra.mxu0 0.0
      %633 = vmatprep.subr.mxu0 0.0
      %634 = vmatpush1.msra.mxu0 0.0
      %635 = vmatprep.subr.mxu0 0.0
      %636 = vmatpush1.msra.mxu0 0.0
      %637 = vmatprep.subr.mxu0 0.0
      %638 = vmatpush1.msra.mxu0 0.0
      %639 = vmatprep.subr.mxu0 0.0
      %640 = vmatpush1.msra.mxu0 0.0
      %641 = vmatprep.subr.mxu0 0.0
      %642 = vmatpush1.msra.mxu0 0.0
      %643 = vmatprep.subr.mxu0 0.0
      %644 = vmatpush1.msra.mxu0 0.0
      %645 = vmatprep.subr.mxu0 0.0
      %646 = vmatpush1.msra.mxu0 0.0
      %647 = vmatprep.subr.mxu0 0.0
      %648 = vmatpush1.msra.mxu0 0.0
      %649 = vmatprep.subr.mxu0 0.0
      %650 = vmatpush1.msra.mxu0 0.0
      %651 = vmatprep.subr.mxu0 0.0
      %652 = vmatpush1.msra.mxu0 0.0
      %653 = vmatprep.subr.mxu0 0.0
      %654 = vmatpush1.msra.mxu0 0.0
      %655 = vmatprep.subr.mxu0 0.0
      %656 = vmatpush1.msra.mxu0 0.0
      %657 = vmatprep.subr.mxu0 0.0
      %658 = vmatpush1.msra.mxu0 0.0
      %659 = vmatprep.subr.mxu0 0.0
      %660 = vmatpush1.msra.mxu0 0.0
      %661 = vmatprep.subr.mxu0 0.0
      %662 = vmatpush1.msra.mxu0 0.0
      %663 = vmatprep.subr.mxu0 0.0
      %664 = vmatpush1.msra.mxu0 0.0
      %665 = vmatprep.mubr.f32.mxu0 0.0
      %666 = vmatmul.mubr.f32.gmra.mrb[0].mxu0 %v592
      %v667 = vpop.f32.mrb[0].mxu0
      %v668 = vadd.f32 %v588, %v667
      %v669 = vpop.f32.mrb[0].mxu0
      %v670 = vadd.f32 %v588, %v669
      %671 = vdwg.mxu0
      %672 = vrot.lane.b32.xlu0 %v668, 1
      %v673 = vpop.permute.xlu0 %672
      %674 = vrot.lane.b32.xlu0 %v670, 1
      %v675 = vpop.permute.xlu0 %674
      %v676 = vsel %vm393, %v673, %v675
      %v677 = vsel %vm393, %v675, %v673
      %678 = vrot.lane.b32.xlu0 %v668, 127
      %v679 = vpop.permute.xlu0 %678
      %680 = vrot.lane.b32.xlu0 %v670, 127
      %v681 = vpop.permute.xlu0 %680
      %v682 = vsel %vm443, %v679, %v681
      %v683 = vsel %vm443, %v681, %v679
      %v684 = vsel %vm398, %v677, %v682
      %v685 = vsel %vm399, %v676, %v683
      %v686 = vmax.f32 %v668, %v684
      %v687 = vmax.f32 %v670, %v685
      %688 = vrot.lane.b32.xlu0 %v686, 2
      %v689 = vpop.permute.xlu0 %688
      %690 = vrot.lane.b32.xlu0 %v687, 2
      %v691 = vpop.permute.xlu0 %690
      %v692 = vsel %vm404, %v689, %v691
      %v693 = vsel %vm404, %v691, %v689
      %694 = vrot.lane.b32.xlu0 %v686, 126
      %v695 = vpop.permute.xlu0 %694
      %696 = vrot.lane.b32.xlu0 %v687, 126
      %v697 = vpop.permute.xlu0 %696
      %v698 = vsel %vm460, %v695, %v697
      %v699 = vsel %vm460, %v697, %v695
      %v700 = vsel %vm409, %v693, %v698
      %v701 = vsel %vm410, %v692, %v699
      %v702 = vmax.f32 %v686, %v700
      %v703 = vmax.f32 %v687, %v701
      %704 = vrot.lane.b32.xlu0 %v702, 4
      %v705 = vpop.permute.xlu0 %704
      %706 = vrot.lane.b32.xlu0 %v703, 4
      %v707 = vpop.permute.xlu0 %706
      %v708 = vsel %vm415, %v705, %v707
      %v709 = vsel %vm415, %v707, %v705
      %710 = vrot.lane.b32.xlu0 %v702, 124
      %v711 = vpop.permute.xlu0 %710
      %712 = vrot.lane.b32.xlu0 %v703, 124
      %v713 = vpop.permute.xlu0 %712
      %v714 = vsel %vm477, %v711, %v713
      %v715 = vsel %vm477, %v713, %v711
      %v716 = vsel %vm420, %v709, %v714
      %v717 = vsel %vm421, %v708, %v715
      %v718 = vmax.f32 %v702, %v716
      %v719 = vmax.f32 %v703, %v717
      %720 = vrot.lane.b32.xlu0 %v718, 8
      %v721 = vpop.permute.xlu0 %720
      %722 = vrot.lane.b32.xlu0 %v719, 8
      %v723 = vpop.permute.xlu0 %722
      %v724 = vsel %vm426, %v721, %v723
      %v725 = vsel %vm426, %v723, %v721
      %726 = vrot.lane.b32.xlu0 %v718, 120
      %v727 = vpop.permute.xlu0 %726
      %728 = vrot.lane.b32.xlu0 %v719, 120
      %v729 = vpop.permute.xlu0 %728
      %v730 = vsel %vm494, %v727, %v729
      %v731 = vsel %vm494, %v729, %v727
      %v732 = vsel %vm431, %v725, %v730
      %v733 = vsel %vm432, %v724, %v731
      %v734 = vmax.f32 %v718, %v732
      %v735 = vmax.f32 %v719, %v733
      %v736 = vmax.f32 %v734, 0.0
      %v737 = vmax.f32 %v735, 0.0
      %v738 = vld [vmem:[%s266] sm:$0xff]
      %v740 = vcombine.high %v738, %v738
      %v742 = vadd.f32 %v736, %v738
      %v743 = vadd.f32 %v737, %v740
      %v746 = vcombine.low %v742, %v743
      %748 = vst [vmem:[%s271] sm:$0xff] %v746
      %p749 = scmp.lt.s32.totalorder %s17, 1
      %s750 = scalar_select %p749, %s17, 1
      %s751 = smul.addr %s750, 2
      %s752 = smul.addr %s751, 4
      %s753 = scalar_lea.vmem %s6, %s752
      // Predicated region
      $region45: #{cross_transformer.1} parent=43 // pred_check
        %p754 = pneg %p171
      $region46: #{cross_transformer.1} parent=43 // pred_check_branch
        %756 = sbr.rel (%p754) target = $region48
      $region47: #{cross_transformer.1} parent=43 // pred_region
        _
      $region48: #{cross_transformer.1} parent=43 // pred_fallthru
        _
    $region44: #{cross_transformer.1} parent=5 // pred_fallthru
      _
    %p757 = scmp.le.s32.totalorder 2, %s12
    // Predicated region
    $region49: #{cross_transformer.1} parent=5 // pred_check
      %p758 = pneg %p757
    $region50: #{cross_transformer.1} parent=5 // pred_check_branch
      %760 = sbr.rel (%p758) target = $region52
    $region51: #{cross_transformer.1} parent=5 // pred_region
      %s761 = ssub.s32 %s12, 2
      // Predicated region
      $region53: #{cross_transformer.1} parent=51 // pred_check
        %p762 = pneg %p177
      $region54: #{cross_transformer.1} parent=51 // pred_check_branch
        %764 = sbr.rel (%p762) target = $region56
      $region55: #{cross_transformer.1} parent=51 // pred_region
        %p765 = scmp.lt.s32.totalorder %s18, 1
        %s766 = scalar_select %p765, %s18, 1
        %s767 = smul.addr %s766, 2
        %s768 = smul.addr %s767, 4
        %s769 = scalar_lea.vmem %s6, %s768
      $region56: #{cross_transformer.1} parent=51 // pred_fallthru
        _
    $region52: #{cross_transformer.1} parent=5 // pred_fallthru
      _
  $region6: #{cross_transformer.1} parent=0 // loop_footer
    %s16 = sadd.s32 1, %s12
  $region7: #{cross_transformer.1} parent=0 // loop_footer_branch
    %11 = sbr.rel target = $region3
  $region8: #{cross_transformer.1} parent=0 // loop_exit
    _

</llo_original>
